<compile_context>
chip_gen: v5e
topology: v5e:2x2
jax: 0.10.0
libtpu: 0.0.40
codegen_flags: <defaults>
</compile_context>

<pallas_src>
import functools

import jax
import jax.numpy as jnp
from jax import lax
from jax.experimental import pallas as pl
from jax.experimental.pallas import tpu as pltpu


def _round_up(x, m):
    return (x + m - 1) // m * m


def _vmem_caps():
    """(physical VMEM capacity, per-pass tile budget) — generation aware."""
    cap = 64 << 20
    try:
        info = pltpu.get_tpu_info()
        cap = int(getattr(info, "vmem_capacity_bytes", cap))
    except Exception:
        pass
    if cap >= (96 << 20):          # v5e / v6e: 128 MiB physical VMEM
        budget = 48 << 20
    else:                          # v7x: 64 MiB physical VMEM
        budget = 32 << 20
    return cap, budget


def _pick_tile(np0, per_lane_bytes, fixed_bytes, budget, cap_lanes):
    """Largest lane-tile (multiple of 128) fitting the budget; when it cannot
    cover N in one tile, prefer tiles >= 512 that minimize spatial padding."""
    avail = budget - fixed_bytes
    tn_max = 128
    if avail > 0:
        tn_max = max(128, (avail // max(per_lane_bytes, 1)) // 128 * 128)
    tn_max = min(tn_max, cap_lanes)
    if np0 <= tn_max:
        return np0
    lo = 512 if tn_max >= 512 else 128
    best_tn = lo
    best_waste = _round_up(np0, lo) - np0
    tn = lo
    while tn <= tn_max:
        waste = _round_up(np0, tn) - np0
        if waste < best_waste or (waste == best_waste and tn > best_tn):
            best_tn, best_waste = tn, waste
        tn += 128
    return best_tn


def _softmax_rows(energy, c, c_padded, approx_recip):
    """softmax(max(E) - E) over the last axis, computed as exp(min(E) - E)/sum.
    Padded channel columns (>= c) are masked with a select (not a multiply)."""
    if c_padded != c:
        col = lax.broadcasted_iota(jnp.int32, energy.shape, 1)
        valid = col < c
        e_min = jnp.min(jnp.where(valid, energy, jnp.inf), axis=-1, keepdims=True)
        p = jnp.where(valid, jnp.exp(e_min - energy), 0.0)
    else:
        e_min = jnp.min(energy, axis=-1, keepdims=True)
        p = jnp.exp(e_min - energy)
    denom = jnp.sum(p, axis=-1, keepdims=True)          # always >= 1
    if approx_recip:
        return p * pl.reciprocal(denom, approx=True)
    return p / denom


def _energy_kernel_flat(c, c_padded, approx_recip):
    """Pass 1 (no row tiling): grid = (B, kt)."""

    def kernel(x_ref, attn_ref, acc_ref):
        k = pl.program_id(1)

        @pl.when(k == 0)
        def _():
            acc_ref[...] = jnp.zeros_like(acc_ref)

        xt = x_ref[0]                                    # (Cp, tn), mxu dtype
        acc_ref[...] += lax.dot_general(
            xt, xt, (((1,), (1,)), ((), ())),
            preferred_element_type=jnp.float32)

        @pl.when(k == pl.num_programs(1) - 1)
        def _():
            attn_ref[0] = _softmax_rows(
                acc_ref[...], c, c_padded, approx_recip).astype(attn_ref.dtype)

    return kernel


def _energy_kernel_rows(c, c_padded, approx_recip):
    """Pass 1 (row tiled): grid = (B, row_tiles, kt)."""

    def kernel(xr_ref, xa_ref, attn_ref, acc_ref):
        k = pl.program_id(2)

        @pl.when(k == 0)
        def _():
            acc_ref[...] = jnp.zeros_like(acc_ref)

        acc_ref[...] += lax.dot_general(
            xr_ref[0], xa_ref[0], (((1,), (1,)), ((), ())),
            preferred_element_type=jnp.float32)          # (tr, Cp) f32

        @pl.when(k == pl.num_programs(2) - 1)
        def _():
            attn_ref[0] = _softmax_rows(
                acc_ref[...], c, c_padded, approx_recip).astype(attn_ref.dtype)

    return kernel


def _make_apply_kernel(mxu_dtype):
    """Pass 2: out_tile = gamma * (attn @ x_tile) + x_tile."""

    def kernel(gamma_ref, attn_ref, x_ref, o_ref):
        x = x_ref[0]                                     # (Cp, tn), mxu dtype
        attn = attn_ref[0]
        if attn.dtype != mxu_dtype:
            attn = attn.astype(mxu_dtype)
        out = jnp.dot(attn, x, preferred_element_type=jnp.float32)
        o_ref[0] = (gamma_ref[0] * out + x.astype(jnp.float32)
                    ).astype(o_ref.dtype)

    return kernel


def cam_module(x, gamma, *, mxu_dtype=jnp.bfloat16, approx_reciprocal=None,
               vmem_budget_bytes=None, max_tile_lanes=4096):
    """x: (B, C, H, W), gamma: (1,)  ->  (B, C, H, W) channel attention."""
    B, C, H, W = x.shape
    N = H * W
    x_dtype = x.dtype
    mxu_dtype = jnp.dtype(mxu_dtype)
    if approx_reciprocal is None:
        approx_reciprocal = mxu_dtype != jnp.dtype(jnp.float32)

    Cp = _round_up(C, 8)            # sublane alignment
    Np0 = _round_up(N, 128)         # lane alignment
    mxu_sz = mxu_dtype.itemsize
    out_sz = jnp.dtype(x_dtype).itemsize

    cap, auto_budget = _vmem_caps()
    budget = auto_budget if vmem_budget_bytes is None else int(vmem_budget_bytes)

    # Store the attention matrix in the MXU dtype only once it is big enough
    # for the HBM/VMEM saving to matter.
    attn_dtype = mxu_dtype if Cp >= 256 else jnp.dtype(jnp.float32)
    attn_sz = attn_dtype.itemsize

    # Single-buffer the (Cp, Cp) attn block in pass 2 when it is large: it only
    # changes at batch boundaries (frees a whole buffer of VMEM on v7x).
    single_buffer_attn = (Cp >= 1024) and hasattr(pl, "Buffered")
    n_attn_bufs = 1 if single_buffer_attn else 2

    # Row-tile pass 1 for large C (keeps both TensorCores busy at B == 1 and
    # shrinks the resident accumulator / parallelizes the exp epilogue).
    row_tiled = (Cp >= 256) and (Cp % 128 == 0)
    tr = 128 if row_tiled else Cp
    rt = Cp // tr

    # ---- tile sizes (lane axis), budgets honored including fixed blocks ----
    per_lane2 = 2 * Cp * mxu_sz + 2 * Cp * out_sz              # x in + out
    fixed2 = n_attn_bufs * Cp * Cp * attn_sz
    tn2 = _pick_tile(Np0, per_lane2, fixed2, budget, max_tile_lanes)
    Np = _round_up(Np0, tn2)
    kt2 = Np // tn2

    per_lane1 = 2 * (tr + (Cp if row_tiled else 0)) * mxu_sz   # x tiles only
    fixed1 = tr * Cp * 4 + 2 * tr * Cp * attn_sz               # scratch + out
    avail1 = max(budget - fixed1, 0)
    m_max = max(avail1 // max(per_lane1 * tn2, 1), 1)
    m = 1
    for d in range(1, kt2 + 1):                                # tn1 = m * tn2
        if kt2 % d == 0 and d <= m_max and d * tn2 <= max_tile_lanes:
            m = d
    tn1 = m * tn2
    kt1 = Np // tn1

    foot1 = per_lane1 * tn1 + fixed1
    foot2 = per_lane2 * tn2 + fixed2

    def _limit(foot):
        want = max(int(foot * 2) + (4 << 20), 32 << 20)
        lim = min(cap - (2 << 20), want)
        return int(max(lim, foot + (2 << 20)))

    limit1, limit2 = _limit(foot1), _limit(foot2)

    # ---- pad / cast x once in the wrapper (fused with the pad HBM copy) ----
    xf = x.reshape(B, C, N)
    if xf.dtype != mxu_dtype:
        xf = xf.astype(mxu_dtype)
    if (Cp, Np) != (C, N):
        xf = jnp.pad(xf, ((0, 0), (0, Cp - C), (0, Np - N)))

    # ---- Pass 1: attention matrix (B, Cp, Cp) ------------------------------
    attn_shape = jax.ShapeDtypeStruct((B, Cp, Cp), attn_dtype)
    flops1 = 2 * B * Cp * Cp * Np
    bytes1 = B * Cp * Np * mxu_sz * (2 if row_tiled else 1) + B * Cp * Cp * attn_sz
    cost1 = pl.CostEstimate(flops=int(flops1), transcendentals=int(B * Cp * Cp),
                            bytes_accessed=int(bytes1))

    if row_tiled:
        attn = pl.pallas_call(
            _energy_kernel_rows(C, Cp, approx_reciprocal),
            out_shape=attn_shape,
            grid_spec=pltpu.PrefetchScalarGridSpec(
                num_scalar_prefetch=0,
                grid=(B, rt, kt1),
                in_specs=[
                    pl.BlockSpec((1, tr, tn1), lambda b, r, k: (b, r, k)),
                    pl.BlockSpec((1, Cp, tn1), lambda b, r, k: (b, 0, k)),
                ],
                out_specs=pl.BlockSpec((1, tr, Cp), lambda b, r, k: (b, r, 0)),
                scratch_shapes=[pltpu.VMEM((tr, Cp), jnp.float32)],
            ),
            compiler_params=pltpu.CompilerParams(
                dimension_semantics=("parallel", "parallel", "arbitrary"),
                vmem_limit_bytes=limit1),
            cost_estimate=cost1,
        )(xf, xf)
    else:
        attn = pl.pallas_call(
            _energy_kernel_flat(C, Cp, approx_reciprocal),
            out_shape=attn_shape,
            grid_spec=pltpu.PrefetchScalarGridSpec(
                num_scalar_prefetch=0,
                grid=(B, kt1),
                in_specs=[pl.BlockSpec((1, Cp, tn1), lambda b, k: (b, 0, k))],
                out_specs=pl.BlockSpec((1, Cp, Cp), lambda b, k: (b, 0, 0)),
                scratch_shapes=[pltpu.VMEM((Cp, Cp), jnp.float32)],
            ),
            compiler_params=pltpu.CompilerParams(
                dimension_semantics=("parallel", "arbitrary"),
                vmem_limit_bytes=limit1),
            cost_estimate=cost1,
        )(xf)

    # ---- Pass 2: out = gamma * (attn @ X) + X, tiled over N ----------------
    attn_spec_kwargs = {}
    if single_buffer_attn:
        attn_spec_kwargs["pipeline_mode"] = pl.Buffered(1)
    gamma_f32 = gamma.astype(jnp.float32).reshape((1,))

    out_flat = pl.pallas_call(
        _make_apply_kernel(mxu_dtype),
        out_shape=jax.ShapeDtypeStruct((B, Cp, Np), x_dtype),
        grid_spec=pltpu.PrefetchScalarGridSpec(
            num_scalar_prefetch=0,
            grid=(B, kt2),
            in_specs=[
                pl.BlockSpec(memory_space=pltpu.MemorySpace.SMEM),       # gamma
                pl.BlockSpec((1, Cp, Cp), lambda b, k: (b, 0, 0),
                             **attn_spec_kwargs),                        # attn
                pl.BlockSpec((1, Cp, tn2), lambda b, k: (b, 0, k)),      # x
            ],
            out_specs=pl.BlockSpec((1, Cp, tn2), lambda b, k: (b, 0, k)),
        ),
        compiler_params=pltpu.CompilerParams(
            dimension_semantics=("parallel", "parallel"),
            vmem_limit_bytes=limit2),
        cost_estimate=pl.CostEstimate(
            flops=int(2 * B * Cp * Cp * Np + 3 * B * Cp * Np),
            transcendentals=0,
            bytes_accessed=int(B * Cp * Np * (mxu_sz + out_sz)
                               + B * Cp * Cp * attn_sz)),
    )(gamma_f32, attn, xf)

    return out_flat[:, :C, :N].reshape(B, C, H, W)


# ---------------------------------------------------------------------------
# References for testing.
# ---------------------------------------------------------------------------
def cam_reference(x, gamma):
    """Exact f32 reference matching the PyTorch module."""
    B, C, H, W = x.shape
    xf = x.reshape(B, C, H * W).astype(jnp.float32)
    energy = jnp.einsum("bcn,bdn->bcd", xf, xf)
    energy_new = jnp.max(energy, axis=-1, keepdims=True) - energy
    attn = jax.nn.softmax(energy_new, axis=-1)
    out = jnp.einsum("bcd,bdn->bcn", attn, xf).reshape(B, C, H, W)
    return gamma[0] * out + x


def cam_reference_bf16(x, gamma):
    """Quantization-aware reference: bf16 MXU operands + bf16-rounded residual,
    mirroring the kernel's default precision policy."""
    B, C, H, W = x.shape
    xb = x.reshape(B, C, H * W).astype(jnp.bfloat16)
    energy = jnp.einsum("bcn,bdn->bcd", xb, xb,
                        preferred_element_type=jnp.float32)
    e_min = jnp.min(energy, axis=-1, keepdims=True)
    p = jnp.exp(e_min - energy)
    attn = (p / jnp.sum(p, axis=-1, keepdims=True)).astype(jnp.bfloat16)
    out = jnp.einsum("bcd,bdn->bcn", attn, xb,
                     preferred_element_type=jnp.float32).reshape(B, C, H, W)
    return gamma[0] * out + xb.reshape(B, C, H, W).astype(jnp.float32)


if __name__ == "__main__":
    key = jax.random.PRNGKey(0)
    k1, k2 = jax.random.split(key)

    cam_f32 = jax.jit(functools.partial(cam_module, mxu_dtype=jnp.float32))
    cam_bf16 = jax.jit(cam_module)
    cam_small_tiles = jax.jit(functools.partial(cam_module,
                                                vmem_budget_bytes=8 * 1024))
    cam_row_tiled = jax.jit(functools.partial(cam_module,
                                              vmem_budget_bytes=512 * 1024))

    # ---- Test 1: module-sized shapes (B=2, C=4, 16x16) ---------------------
    B, C, H, W = 2, 4, 16, 16
    x = 0.25 * jax.random.normal(k1, (B, C, H, W), dtype=jnp.float32)

    for g in (0.0, 0.5):
        gamma = jnp.full((1,), g, dtype=jnp.float32)

        # f32 MXU path (exact reciprocal) vs. exact f32 reference.
        out_f32 = jax.block_until_ready(cam_f32(x, gamma))
        ref = cam_reference(x, gamma)
        assert out_f32.shape == (B, C, H, W)
        assert jnp.allclose(out_f32, ref, atol=5e-3, rtol=1e-2), (
            f"f32-path mismatch at gamma={g}")

        # Default bf16 path vs. bf16-quantization-aware reference.
        out_bf16 = jax.block_until_ready(cam_bf16(x, gamma))
        ref_bf16 = cam_reference_bf16(x, gamma)
        assert jnp.allclose(out_bf16, ref_bf16, atol=2e-2, rtol=2e-2), (
            f"bf16-path mismatch at gamma={g}")

    # ---- Test 2: tiny VMEM budget forces multi-tile N accumulation ---------
    gamma = jnp.full((1,), 0.5, dtype=jnp.float32)
    out_t = jax.block_until_ready(cam_small_tiles(x, gamma))
    assert jnp.allclose(out_t, cam_reference_bf16(x, gamma),
                        atol=2e-2, rtol=2e-2), "tiled-N accumulation mismatch"

    # ---- Test 3: row-tiled pass 1 + bf16 attention storage (C=256) ---------
    B2, C2, H2, W2 = 1, 256, 16, 16
    x2 = 0.05 * jax.random.normal(k2, (B2, C2, H2, W2), dtype=jnp.float32)
    out2 = jax.block_until_ready(cam_row_tiled(x2, gamma))
    assert out2.shape == (B2, C2, H2, W2)
    assert jnp.allclose(out2, cam_reference_bf16(x2, gamma),
                        atol=1e-2, rtol=5e-2), "row-tiled pass-1 mismatch"

    print("KERNEL_OK")
</pallas_src>

<mosaic_0001>
module attributes {stable_mosaic.version = 11 : i64} {
  func.func @kernel(%arg0: i32, %arg1: i32, %arg2: memref<1xf32, #tpu.memory_space<smem>>, %arg3: memref<1x8x8xf32, #tpu.memory_space<vmem>>, %arg4: memref<1x8x256xf32, #tpu.memory_space<vmem>>, %arg5: memref<1x8x256xf32, #tpu.memory_space<vmem>>) attributes {dimension_semantics = [#tpu.dimension_semantics<parallel>, #tpu.dimension_semantics<parallel>], iteration_bounds = array<i64: 2, 1>, scalar_prefetch = 0 : i64, scratch_operands = 0 : i64, tpu.core_type = #tpu.core_type<tc>, window_params = [{transform_indices = @transform_0, window_bounds = array<i64: 1>}, {transform_indices = @transform_1, window_bounds = array<i64: 1, 8, 8>}, {transform_indices = @transform_2, window_bounds = array<i64: 1, 8, 256>}, {transform_indices = @transform_3, window_bounds = array<i64: 1, 8, 256>}]} {
    %c0 = arith.constant 0 : index
    %c0_0 = arith.constant 0 : index
    %c0_1 = arith.constant 0 : index
    %0 = vector.load %arg4[%c0, %c0_0, %c0_1] : memref<1x8x256xf32, #tpu.memory_space<vmem>>, vector<1x8x256xf32>
    %1 = vector.shape_cast %0 : vector<1x8x256xf32> to vector<8x256xf32>
    %c0_2 = arith.constant 0 : index
    %c0_3 = arith.constant 0 : index
    %c0_4 = arith.constant 0 : index
    %2 = vector.load %arg3[%c0_2, %c0_3, %c0_4] : memref<1x8x8xf32, #tpu.memory_space<vmem>>, vector<1x8x8xf32>
    %3 = vector.shape_cast %2 : vector<1x8x8xf32> to vector<8x8xf32>
    %cst = arith.constant dense<0.000000e+00> : vector<8x256xf32>
    %4 = tpu.matmul %3, %1, %cst {dimension_numbers = #tpu.dot_dimension_numbers<[1], [0], [0], [1], [0, 0, 1, 1], [], []>} : vector<8x8xf32>, vector<8x256xf32>, vector<8x256xf32> -> vector<8x256xf32>
    %c0_5 = arith.constant 0 : index
    %5 = memref.load %arg2[%c0_5] : memref<1xf32, #tpu.memory_space<smem>>
    %6 = vector.broadcast %5 : f32 to vector<8x256xf32>
    %7 = arith.mulf %6, %4 : vector<8x256xf32>
    %8 = arith.addf %7, %1 : vector<8x256xf32>
    %c0_6 = arith.constant 0 : index
    %c0_7 = arith.constant 0 : index
    %c0_8 = arith.constant 0 : index
    %9 = vector.load %arg5[%c0_6, %c0_7, %c0_8] : memref<1x8x256xf32, #tpu.memory_space<vmem>>, vector<1x8x256xf32>
    %10 = vector.shape_cast %9 : vector<1x8x256xf32> to vector<8x256xf32>
    %11 = vector.shape_cast %8 : vector<8x256xf32> to vector<1x8x256xf32>
    tpu.vector_store %arg5[%c0_6, %c0_7, %c0_8], %11 {strides = array<i32>} : memref<1x8x256xf32, #tpu.memory_space<vmem>>, vector<1x8x256xf32>,
    return
  }
  func.func @transform_0(%arg0: i32, %arg1: i32) -> i32 {
    %c0_i32 = arith.constant 0 : i32
    %c0_i32_0 = arith.constant 0 : i32
    return %c0_i32 : i32
  }
  func.func @transform_1(%arg0: i32, %arg1: i32) -> (i32, i32, i32) {
    %c0_i32 = arith.constant 0 : i32
    %c0_i32_0 = arith.constant 0 : i32
    %c0_i32_1 = arith.constant 0 : i32
    return %arg0, %c0_i32, %c0_i32_0 : i32, i32, i32
  }
  func.func @transform_2(%arg0: i32, %arg1: i32) -> (i32, i32, i32) {
    %c0_i32 = arith.constant 0 : i32
    %c0_i32_0 = arith.constant 0 : i32
    return %arg0, %c0_i32, %arg1 : i32, i32, i32
  }
  func.func @transform_3(%arg0: i32, %arg1: i32) -> (i32, i32, i32) {
    %c0_i32 = arith.constant 0 : i32
    %c0_i32_0 = arith.constant 0 : i32
    return %arg0, %c0_i32, %arg1 : i32, i32, i32
  }
}

module attributes {stable_mosaic.version = 11 : i64} {
  func.func @kernel(%arg0: i32, %arg1: i32, %arg2: memref<1x8x256xf32, #tpu.memory_space<vmem>>, %arg3: memref<1x8x8xf32, #tpu.memory_space<vmem>>, %arg4: memref<8x8xf32, #tpu.memory_space<vmem>>) attributes {dimension_semantics = [#tpu.dimension_semantics<parallel>, #tpu.dimension_semantics<arbitrary>], iteration_bounds = array<i64: 2, 1>, scalar_prefetch = 0 : i64, scratch_operands = 1 : i64, tpu.core_type = #tpu.core_type<tc>, window_params = [{transform_indices = @transform_0, window_bounds = array<i64: 1, 8, 256>}, {transform_indices = @transform_1, window_bounds = array<i64: 1, 8, 8>}]} {
    %c0_i32 = arith.constant 0 : i32
    %0 = arith.cmpi eq, %arg1, %c0_i32 : i32
    %1 = arith.extui %0 : i1 to i32
    %c0_i32_0 = arith.constant 0 : i32
    %2 = arith.cmpi ne, %1, %c0_i32_0 : i32
    scf.if %2 {
      %cst_9 = arith.constant 0.000000e+00 : f32
      %12 = vector.broadcast %cst_9 : f32 to vector<8x8xf32>
      %c0_10 = arith.constant 0 : index
      %c0_11 = arith.constant 0 : index
      %13 = vector.load %arg4[%c0_10, %c0_11] : memref<8x8xf32, #tpu.memory_space<vmem>>, vector<8x8xf32>
      tpu.vector_store %arg4[%c0_10, %c0_11], %12 {strides = array<i32>} : memref<8x8xf32, #tpu.memory_space<vmem>>, vector<8x8xf32>,
    } else {
    }
    %c0 = arith.constant 0 : index
    %c0_1 = arith.constant 0 : index
    %c0_2 = arith.constant 0 : index
    %3 = vector.load %arg2[%c0, %c0_1, %c0_2] : memref<1x8x256xf32, #tpu.memory_space<vmem>>, vector<1x8x256xf32>
    %4 = vector.shape_cast %3 : vector<1x8x256xf32> to vector<8x256xf32>
    %c0_3 = arith.constant 0 : index
    %c0_4 = arith.constant 0 : index
    %5 = vector.load %arg4[%c0_3, %c0_4] : memref<8x8xf32, #tpu.memory_space<vmem>>, vector<8x8xf32>
    %cst = arith.constant dense<0.000000e+00> : vector<8x8xf32>
    %6 = tpu.matmul %4, %4, %cst {dimension_numbers = #tpu.dot_dimension_numbers<[1], [1], [0], [0], [0, 0, 1, 0], [], []>} : vector<8x256xf32>, vector<8x256xf32>, vector<8x8xf32> -> vector<8x8xf32>
    %7 = arith.addf %5, %6 : vector<8x8xf32>
    %c0_5 = arith.constant 0 : index
    %c0_6 = arith.constant 0 : index
    %8 = vector.load %arg4[%c0_5, %c0_6] : memref<8x8xf32, #tpu.memory_space<vmem>>, vector<8x8xf32>
    tpu.vector_store %arg4[%c0_5, %c0_6], %7 {strides = array<i32>} : memref<8x8xf32, #tpu.memory_space<vmem>>, vector<8x8xf32>,
    %c0_i32_7 = arith.constant 0 : i32
    %9 = arith.cmpi eq, %arg1, %c0_i32_7 : i32
    %10 = arith.extui %9 : i1 to i32
    %c0_i32_8 = arith.constant 0 : i32
    %11 = arith.cmpi ne, %10, %c0_i32_8 : i32
    scf.if %11 {
      %c0_9 = arith.constant 0 : index
      %c0_10 = arith.constant 0 : index
      %12 = vector.load %arg4[%c0_9, %c0_10] : memref<8x8xf32, #tpu.memory_space<vmem>>, vector<8x8xf32>
      %13 = tpu.iota {dimensions = array<i32: 1>} : vector<8x8xi32>
      %c4_i32 = arith.constant 4 : i32
      %14 = vector.broadcast %c4_i32 : i32 to vector<8x8xi32>
      %15 = arith.cmpi slt, %13, %14 : vector<8x8xi32>
      %cst_11 = arith.constant 0x7F800000 : f32
      %16 = vector.broadcast %cst_11 : f32 to vector<8x8xf32>
      %17 = arith.select %15, %12, %16 : vector<8x8xi1>, vector<8x8xf32>
      %cst_12 = arith.constant dense<0x7F800000> : vector<8xf32>
      %18 = vector.multi_reduction <minimumf>, %17, %cst_12 [1] : vector<8x8xf32> to vector<8xf32>
      %19 = vector.shape_cast %18 : vector<8xf32> to vector<8x1xf32>
      %20 = vector.broadcast %19 : vector<8x1xf32> to vector<8x8xf32>
      %21 = arith.subf %20, %12 : vector<8x8xf32>
      %22 = math.exp %21 : vector<8x8xf32>
      %cst_13 = arith.constant 0.000000e+00 : f32
      %23 = vector.broadcast %cst_13 : f32 to vector<8x8xf32>
      %24 = arith.select %15, %22, %23 : vector<8x8xi1>, vector<8x8xf32>
      %cst_14 = arith.constant dense<0.000000e+00> : vector<8xf32>
      %25 = vector.multi_reduction <add>, %24, %cst_14 [1] : vector<8x8xf32> to vector<8xf32>
      %26 = vector.shape_cast %25 : vector<8xf32> to vector<8x1xf32>
      %27 = vector.broadcast %26 : vector<8x1xf32> to vector<8x8xf32>
      %28 = arith.divf %24, %27 : vector<8x8xf32>
      %c0_15 = arith.constant 0 : index
      %c0_16 = arith.constant 0 : index
      %c0_17 = arith.constant 0 : index
      %29 = vector.load %arg3[%c0_15, %c0_16, %c0_17] : memref<1x8x8xf32, #tpu.memory_space<vmem>>, vector<1x8x8xf32>
      %30 = vector.shape_cast %29 : vector<1x8x8xf32> to vector<8x8xf32>
      %31 = vector.shape_cast %28 : vector<8x8xf32> to vector<1x8x8xf32>
      tpu.vector_store %arg3[%c0_15, %c0_16, %c0_17], %31 {strides = array<i32>} : memref<1x8x8xf32, #tpu.memory_space<vmem>>, vector<1x8x8xf32>,
    } else {
    }
    return
  }
  func.func @transform_0(%arg0: i32, %arg1: i32) -> (i32, i32, i32) {
    %c0_i32 = arith.constant 0 : i32
    %c0_i32_0 = arith.constant 0 : i32
    return %arg0, %c0_i32, %arg1 : i32, i32, i32
  }
  func.func @transform_1(%arg0: i32, %arg1: i32) -> (i32, i32, i32) {
    %c0_i32 = arith.constant 0 : i32
    %c0_i32_0 = arith.constant 0 : i32
    %c0_i32_1 = arith.constant 0 : i32
    return %arg0, %c0_i32, %c0_i32_0 : i32, i32, i32
  }
}

</mosaic_0001>

<llo_original>
// kernel: cam_module.2
$region0: #{cam_module.2}
  #allocation0 [shape = 'u32[]', space=smem, size = 0x4, offset = 0x4, fixed_abs, tag = 'smem constant byte address 0x4 - core index']
  #allocation1 [shape = 'u32[72,128]{1,0:T(1,128)}', space=vmem, size = 0x9000, scoped, tag = 'internal scratch']
  #allocation2 [shape = 'f32[8,8]{1,0:T(8,128)}', space=vmem, size = 0x1000, scoped, tag = 'scratch operand']
  %s0 = inlined_call_operand.vmem [shape: f32[2,8,256], index: 0, kind: input, shape index: {}]
  %s1 = inlined_call_operand.vmem [shape: f32[2,8,8], index: 1, kind: output, shape index: {}]
  %s2 = sld [smem:[#allocation0]]
  $region45: #{cam_module.2} parent=0
    _
  %s4 = ssub.s32 1, %s2
  %s5 = scalar_select 0, %s4, %s2
  loop: start=0, step=1, limit=4
  $region2: #{cam_module.2} parent=0 // loop_pre_header
    _
  $region3: #{cam_module.2} parent=0 // loop_header
    %s7 = sphi 0, %s11
    %p8 = scmp.ge.s32.totalorder %s7, 4
    %s14 = sphi 0, %s26
    %s15 = sphi 0, %s22
    %s16 = sphi 0, %s14
    %s17 = sphi 0, %s15
    %s18 = sphi 0, %s16
    %s19 = sphi 0, %s17
    %s31 = sphi 0, %s33
    %s34 = sphi 0, %s31
    %s35 = sphi 0, %s34
    %s51 = sphi 0, %s35
    %s57 = sphi 0, %s59
    %s60 = sphi 0, %s57
    %s61 = sphi 0, %s60
    %s77 = sphi 0, %s61
  $region4: #{cam_module.2} parent=0 // loop_header_branch
    %10 = sbr.rel (%p8) target = $region8
  $region5: #{cam_module.2} parent=0 // loop_body
    %s12 = ssub.s32 %s7, 1
    %s13 = ssub.s32 %s7, 2
    %s20 = sadd.s32 1, %s15
    %p21 = scmp.ge.s32.totalorder %s20, 1
    %s22 = scalar_select %p21, 0, %s20
    %s23 = sadd.s32 1, %s14
    %s24 = scalar_select %p21, %s23, %s14
    %p25 = scmp.ge.s32.totalorder %s24, 2
    %s26 = scalar_select %p25, 0, %s24
    %s27 = ssub.s32 %s14, %s26
    %s28 = ssub.s32 %s15, %s22
    %s29 = sor.u32 %s27, %s28
    %p30 = scmp.eq.s32.totalorder %s29, 0
    %s32 = sadd.s32 %s31, 1
    %s33 = scalar_select %p30, %s31, %s32
    %p36 = pneg %p30
    %p37 = scmp.eq.s32.totalorder %s7, 1
    %p38 = por %p36, %p37
    %p39 = scmp.ne.s32.totalorder %s31, %s34
    %p40 = scmp.eq.s32.totalorder %s7, 0
    %p41 = por %p39, %p40
    %p42 = scmp.ne.s32.totalorder %s31, %s34
    %p43 = scmp.eq.s32.totalorder %s12, 1
    %p44 = por %p42, %p43
    %p45 = scmp.ne.s32.totalorder %s34, %s35
    %p46 = scmp.eq.s32.totalorder %s12, 0
    %p47 = por %p45, %p46
    %p48 = scmp.ne.s32.totalorder %s34, %s35
    %p49 = scmp.eq.s32.totalorder %s13, 1
    %p50 = por %p48, %p49
    %p52 = scmp.ne.s32.totalorder %s35, %s51
    %p53 = scmp.eq.s32.totalorder %s13, 0
    %p54 = por %p52, %p53
    %s55 = ssub.s32 %s14, %s26
    %p56 = scmp.eq.s32.totalorder %s55, 0
    %s58 = sadd.s32 %s57, 1
    %s59 = scalar_select %p56, %s57, %s58
    %p62 = pneg %p56
    %p63 = scmp.eq.s32.totalorder %s7, 1
    %p64 = por %p62, %p63
    %p65 = scmp.ne.s32.totalorder %s57, %s60
    %p66 = scmp.eq.s32.totalorder %s7, 0
    %p67 = por %p65, %p66
    %p68 = scmp.ne.s32.totalorder %s57, %s60
    %p69 = scmp.eq.s32.totalorder %s12, 1
    %p70 = por %p68, %p69
    %p71 = scmp.ne.s32.totalorder %s60, %s61
    %p72 = scmp.eq.s32.totalorder %s12, 0
    %p73 = por %p71, %p72
    %p74 = scmp.ne.s32.totalorder %s60, %s61
    %p75 = scmp.eq.s32.totalorder %s13, 1
    %p76 = por %p74, %p75
    %p78 = scmp.ne.s32.totalorder %s61, %s77
    %p79 = scmp.eq.s32.totalorder %s13, 0
    %p80 = por %p78, %p79
    %p81 = scmp.le.s32.totalorder 1, %s7
    %p82 = scmp.lt.s32.totalorder %s7, 3
    %p83 = pnand %p81, %p82
    %p84 = pneg %p83
    // Predicated region
    $region9: #{cam_module.2} parent=5 // pred_check
      _
    $region10: #{cam_module.2} parent=5 // pred_check_branch
      %86 = sbr.rel (%p83) target = $region12
    $region11: #{cam_module.2} parent=5 // pred_region
      %s87 = ssub.s32 %s7, 1
    $region12: #{cam_module.2} parent=5 // pred_fallthru
      _
    %p88 = scmp.lt.s32.totalorder %s7, 2
    // Predicated region
    $region13: #{cam_module.2} parent=5 // pred_check
      %p89 = pneg %p88
    $region14: #{cam_module.2} parent=5 // pred_check_branch
      %91 = sbr.rel (%p89) target = $region16
    $region15: #{cam_module.2} parent=5 // pred_region
      // Predicated region
      $region17: #{cam_module.2} parent=15 // pred_check
        %p92 = pneg %p41
      $region18: #{cam_module.2} parent=15 // pred_check_branch
        %94 = sbr.rel (%p92) target = $region20
      $region19: #{cam_module.2} parent=15 // pred_region
        %s95 = smul.u32 2, %s15
        %p96 = scmp.lt.s32.totalorder %s14, 1
        %s97 = scalar_select %p96, %s14, 1
        %p98 = scmp.lt.s32.totalorder %s95, 1
        %s99 = scalar_select %p98, %s95, 1
        %s100 = smul.addr %s97, 2
        %s101 = sadd.s32 %s99, %s100
        %s102 = smul.addr %s101, 8
        %s103 = scalar_lea.vmem %s0, %s102
        %s104 = smul.u32 2, %s15
      $region20: #{cam_module.2} parent=15 // pred_fallthru
        _
    $region16: #{cam_module.2} parent=5 // pred_fallthru
      _
    %p105 = scmp.le.s32.totalorder 1, %s7
    %p106 = scmp.lt.s32.totalorder %s7, 3
    %p107 = pnand %p105, %p106
    %p108 = pneg %p107
    // Predicated region
    $region21: #{cam_module.2} parent=5 // pred_check
      _
    $region22: #{cam_module.2} parent=5 // pred_check_branch
      %110 = sbr.rel (%p107) target = $region24
    $region23: #{cam_module.2} parent=5 // pred_region
      %s111 = ssub.s32 %s7, 1
      %s112 = smul.u32 2, %s17
      %p113 = scmp.lt.s32.totalorder %s16, 1
      %s114 = scalar_select %p113, %s16, 1
      %p115 = scmp.lt.s32.totalorder %s112, 1
      %s116 = scalar_select %p115, %s112, 1
      %s117 = smul.addr %s114, 2
      %s118 = sadd.s32 %s116, %s117
      %s119 = smul.addr %s118, 8
      %s120 = scalar_lea.vmem %s0, %s119
      %p121 = pneg %p47
      %p122 = pneg %p44
      %p123 = pneg %p73
      %p124 = pneg %p70
      %p125 = scmp.lt.s32.totalorder %s16, 1
      %s126 = scalar_select %p125, %s16, 1
      %s127 = smul.addr %s126, 8
      %s128 = scalar_lea.vmem %s1, %s127
      %s129 = smul.u32 2, %s17
      %p130 = scmp.lt.s32.totalorder %s16, 1
      %s131 = scalar_select %p130, %s16, 1
      %p132 = scmp.lt.s32.totalorder %s129, 1
      %s133 = scalar_select %p132, %s129, 1
      %s134 = smul.addr %s131, 2
      %s135 = sadd.s32 %s133, %s134
      %s136 = smul.addr %s135, 8
      %s137 = scalar_lea.vmem %s0, %s136
      %s138 = smul.u32 2, %s17
      %p139 = scmp.lt.s32.totalorder %s16, 1
      %s140 = scalar_select %p139, %s16, 1
      %s141 = smul.addr %s140, 8
      %s142 = scalar_lea.vmem %s1, %s141
      %p143 = scmp.eq.s32.totalorder %s17, 0
      // Predicated region
      $region25: #{cam_module.2} parent=23 // pred_check
        %p144 = pneg %p143
      $region26: #{cam_module.2} parent=23 // pred_check_branch
        %146 = sbr.rel (%p144) target = $region28
      $region27: #{cam_module.2} parent=23 // pred_region
        %vm147 = vcmask 64512
        %148 = vst.msk [vmem:[#allocation2] sm:$0xff] %vm147, 0.0
      $region28: #{cam_module.2} parent=23 // pred_fallthru
        _
      %v149 = vld [vmem:[%s137] sm:$0xff]
      %v150 = vld [vmem:[%s137 + $0x8] sm:$0xff]
      %v151 = vld [vmem:[#allocation2] sm:$0xff]
      %152 = vmatpush.xpose.msra.mxu0 0.0
      %153 = vmatpush.xpose.msra.mxu0 0.0
      %154 = vmatpush.xpose.msra.mxu0 0.0
      %155 = vmatpush.xpose.msra.mxu0 0.0
      %156 = vmatpush.xpose.msra.mxu0 0.0
      %157 = vmatpush.xpose.msra.mxu0 0.0
      %158 = vmatpush.xpose.msra.mxu0 0.0
      %159 = vmatpush.xpose.msra.mxu0 0.0
      %160 = vmatpush.xpose.msra.mxu0 0.0
      %161 = vmatpush.xpose.msra.mxu0 0.0
      %162 = vmatpush.xpose.msra.mxu0 0.0
      %163 = vmatpush.xpose.msra.mxu0 0.0
      %164 = vmatpush.xpose.msra.mxu0 0.0
      %165 = vmatpush.xpose.msra.mxu0 0.0
      %166 = vmatpush.xpose.msra.mxu0 0.0
      %167 = vmatpush.xpose.msra.mxu0 %v149
      %168 = vmatmul.f32.gmra.mxu0 %v149
      %v169 = vpop.f32.mrf.mxu0
      %v170 = vadd.f32 0.0, %v169
      %171 = vdwg.mxu0
      %172 = vmatpush.xpose.msra.mxu0 0.0
      %173 = vmatpush.xpose.msra.mxu0 0.0
      %174 = vmatpush.xpose.msra.mxu0 0.0
      %175 = vmatpush.xpose.msra.mxu0 0.0
      %176 = vmatpush.xpose.msra.mxu0 0.0
      %177 = vmatpush.xpose.msra.mxu0 0.0
      %178 = vmatpush.xpose.msra.mxu0 0.0
      %179 = vmatpush.xpose.msra.mxu0 0.0
      %180 = vmatpush.xpose.msra.mxu0 0.0
      %181 = vmatpush.xpose.msra.mxu0 0.0
      %182 = vmatpush.xpose.msra.mxu0 0.0
      %183 = vmatpush.xpose.msra.mxu0 0.0
      %184 = vmatpush.xpose.msra.mxu0 0.0
      %185 = vmatpush.xpose.msra.mxu0 0.0
      %186 = vmatpush.xpose.msra.mxu0 0.0
      %187 = vmatpush.xpose.msra.mxu0 %v150
      %188 = vmatmul.f32.gmra.mxu0 %v150
      %v189 = vpop.f32.mrf.mxu0
      %v190 = vadd.f32 %v170, %v189
      %191 = vdwg.mxu0
      %v192 = vadd.f32 %v151, %v190
      %vm193 = vcmask 64512
      %194 = vst.msk [vmem:[#allocation2] sm:$0xff] %vm193, %v192
      // Predicated region
      $region29: #{cam_module.2} parent=23 // pred_check
        %p195 = pneg %p143
      $region30: #{cam_module.2} parent=23 // pred_check_branch
        %197 = sbr.rel (%p195) target = $region32
      $region31: #{cam_module.2} parent=23 // pred_region
        %v198 = vld [vmem:[#allocation2] sm:$0xff]
        %v199 = vlaneseq
        %v200 = vand.u32 %v199, 127
        %vm201 = vcmp.lt.s32.totalorder %v200, 4
        %v202 = vsel %vm201, %v198, inf
        %v203 = vsel %vm193, %v202, inf
        %204 = vmin.xlane.f32.xlu0 %v203
        %v205 = vpop.xlane.xlu0 %204
        %v206 = vsub.f32 %v205, %v198
        %v207 = vmul.f32 %v206, 1.442695
        %v208 = vpow.pop %v207
        %v209 = vsel %vm201, %v208, 0.0
        %v210 = vsel %vm193, %v209, 0.0
        %211 = vadd.xlane.f32.xlu0 %v210
        %v212 = vpop.xlane.xlu0 %211
        %v213 = vrcp.pop %v212
        %v214 = vmul.f32 %v212, %v213
        %v215 = vsub.f32 1.0, %v214
        %v216 = vmul.f32 %v213, %v215
        %v217 = vadd.f32 %v213, %v216
        %vm218 = vweird.f32 %v212
        %vm219 = vweird.f32 %v213
        %vm220 = vmor %vm218, %vm219
        %v221 = vsel %vm220, %v213, %v217
        %v222 = vand.u32 2147483647, %v212
        %vm223 = vcmp.eq.f32.partialorder %v222, 8.507059e+37
        %v224 = vand.u32 %v212, 2147483648
        %v225 = vor.u32 1.1754944e-38, %v224
        %v226 = vsel %vm223, %v225, %v221
        %v227 = vmul.f32 %v209, %v226
        %228 = vst.msk [vmem:[%s142] sm:$0xff] %vm193, %v227
      $region32: #{cam_module.2} parent=23 // pred_fallthru
        _
      %p229 = scmp.lt.s32.totalorder %s16, 1
      %s230 = scalar_select %p229, %s16, 1
      %s231 = smul.addr %s230, 8
      %s232 = scalar_lea.vmem %s1, %s231
      // Predicated region
      $region33: #{cam_module.2} parent=23 // pred_check
        %p233 = pneg %p70
      $region34: #{cam_module.2} parent=23 // pred_check_branch
        %235 = sbr.rel (%p233) target = $region36
      $region35: #{cam_module.2} parent=23 // pred_region
        _
      $region36: #{cam_module.2} parent=23 // pred_fallthru
        _
    $region24: #{cam_module.2} parent=5 // pred_fallthru
      _
    %p236 = scmp.le.s32.totalorder 2, %s7
    // Predicated region
    $region37: #{cam_module.2} parent=5 // pred_check
      %p237 = pneg %p236
    $region38: #{cam_module.2} parent=5 // pred_check_branch
      %239 = sbr.rel (%p237) target = $region40
    $region39: #{cam_module.2} parent=5 // pred_region
      %s240 = ssub.s32 %s7, 2
      // Predicated region
      $region41: #{cam_module.2} parent=39 // pred_check
        %p241 = pneg %p76
      $region42: #{cam_module.2} parent=39 // pred_check_branch
        %243 = sbr.rel (%p241) target = $region44
      $region43: #{cam_module.2} parent=39 // pred_region
        %p244 = scmp.lt.s32.totalorder %s18, 1
        %s245 = scalar_select %p244, %s18, 1
        %s246 = smul.addr %s245, 8
        %s247 = scalar_lea.vmem %s1, %s246
      $region44: #{cam_module.2} parent=39 // pred_fallthru
        _
    $region40: #{cam_module.2} parent=5 // pred_fallthru
      _
  $region6: #{cam_module.2} parent=0 // loop_footer
    %s11 = sadd.s32 1, %s7
  $region7: #{cam_module.2} parent=0 // loop_footer_branch
    %6 = sbr.rel target = $region3
  $region8: #{cam_module.2} parent=0 // loop_exit
    _

// kernel: cam_module.3
$region0: #{cam_module.3}
  #allocation0 [shape = 'u32[]', space=smem, size = 0x4, offset = 0x4, fixed_abs, tag = 'smem constant byte address 0x4 - core index']
  #allocation1 [shape = 'u32[72,128]{1,0:T(1,128)}', space=vmem, size = 0x9000, scoped, tag = 'internal scratch']
  #allocation2 [shape = 'f32[1]{0:T(128)S(6)}', space=smem, size = 0x200, scoped, tag = 'scoped memory for cam_module.3']
  %s0 = inlined_call_operand.<no memory space> [shape: f32[1], index: 0, kind: input, shape index: {}]
  %s1 = inlined_call_operand.vmem [shape: f32[2,8,8], index: 1, kind: input, shape index: {}]
  %s2 = inlined_call_operand.vmem [shape: f32[2,8,256], index: 2, kind: input, shape index: {}]
  %s3 = inlined_call_operand.vmem [shape: f32[2,8,256], index: 3, kind: output, shape index: {}]
  %s4 = sld [smem:[#allocation0]]
  $region45: #{cam_module.3} parent=0
    _
  %s6 = ssub.s32 1, %s4
  %s7 = scalar_select 0, %s6, %s4
  %8 = sst [smem:[#allocation2]] %s0
  loop: start=0, step=1, limit=4
  $region2: #{cam_module.3} parent=0 // loop_pre_header
    _
  $region3: #{cam_module.3} parent=0 // loop_header
    %s10 = sphi 0, %s14
    %p11 = scmp.ge.s32.totalorder %s10, 4
    %s17 = sphi 0, %s29
    %s18 = sphi 0, %s25
    %s19 = sphi 0, %s17
    %s20 = sphi 0, %s18
    %s21 = sphi 0, %s19
    %s22 = sphi 0, %s20
    %s30 = sphi 0, %s30
    %s32 = sphi 0, %s30
    %s33 = sphi 0, %s32
    %s47 = sphi 0, %s33
    %s53 = sphi 0, %s55
    %s56 = sphi 0, %s53
    %s57 = sphi 0, %s56
    %s73 = sphi 0, %s57
    %s81 = sphi 0, %s83
    %s84 = sphi 0, %s81
    %s85 = sphi 0, %s84
    %s101 = sphi 0, %s85
    %s109 = sphi 0, %s111
    %s112 = sphi 0, %s109
    %s113 = sphi 0, %s112
    %s129 = sphi 0, %s113
  $region4: #{cam_module.3} parent=0 // loop_header_branch
    %13 = sbr.rel (%p11) target = $region8
  $region5: #{cam_module.3} parent=0 // loop_body
    %s15 = ssub.s32 %s10, 1
    %s16 = ssub.s32 %s10, 2
    %s23 = sadd.s32 1, %s18
    %p24 = scmp.ge.s32.totalorder %s23, 1
    %s25 = scalar_select %p24, 0, %s23
    %s26 = sadd.s32 1, %s17
    %s27 = scalar_select %p24, %s26, %s17
    %p28 = scmp.ge.s32.totalorder %s27, 2
    %s29 = scalar_select %p28, 0, %s27
    %s31 = sadd.s32 %s30, 1
    %p34 = scmp.eq.s32.totalorder %s10, 1
    %p35 = scmp.ne.s32.totalorder %s30, %s32
    %p36 = scmp.eq.s32.totalorder %s10, 0
    %p37 = por %p35, %p36
    %p38 = scmp.ne.s32.totalorder %s30, %s32
    %p39 = scmp.eq.s32.totalorder %s15, 1
    %p40 = por %p38, %p39
    %p41 = scmp.ne.s32.totalorder %s32, %s33
    %p42 = scmp.eq.s32.totalorder %s15, 0
    %p43 = por %p41, %p42
    %p44 = scmp.ne.s32.totalorder %s32, %s33
    %p45 = scmp.eq.s32.totalorder %s16, 1
    %p46 = por %p44, %p45
    %p48 = scmp.ne.s32.totalorder %s33, %s47
    %p49 = scmp.eq.s32.totalorder %s16, 0
    %p50 = por %p48, %p49
    %s51 = ssub.s32 %s17, %s29
    %p52 = scmp.eq.s32.totalorder %s51, 0
    %s54 = sadd.s32 %s53, 1
    %s55 = scalar_select %p52, %s53, %s54
    %p58 = pneg %p52
    %p59 = scmp.eq.s32.totalorder %s10, 1
    %p60 = por %p58, %p59
    %p61 = scmp.ne.s32.totalorder %s53, %s56
    %p62 = scmp.eq.s32.totalorder %s10, 0
    %p63 = por %p61, %p62
    %p64 = scmp.ne.s32.totalorder %s53, %s56
    %p65 = scmp.eq.s32.totalorder %s15, 1
    %p66 = por %p64, %p65
    %p67 = scmp.ne.s32.totalorder %s56, %s57
    %p68 = scmp.eq.s32.totalorder %s15, 0
    %p69 = por %p67, %p68
    %p70 = scmp.ne.s32.totalorder %s56, %s57
    %p71 = scmp.eq.s32.totalorder %s16, 1
    %p72 = por %p70, %p71
    %p74 = scmp.ne.s32.totalorder %s57, %s73
    %p75 = scmp.eq.s32.totalorder %s16, 0
    %p76 = por %p74, %p75
    %s77 = ssub.s32 %s17, %s29
    %s78 = ssub.s32 %s18, %s25
    %s79 = sor.u32 %s77, %s78
    %p80 = scmp.eq.s32.totalorder %s79, 0
    %s82 = sadd.s32 %s81, 1
    %s83 = scalar_select %p80, %s81, %s82
    %p86 = pneg %p80
    %p87 = scmp.eq.s32.totalorder %s10, 1
    %p88 = por %p86, %p87
    %p89 = scmp.ne.s32.totalorder %s81, %s84
    %p90 = scmp.eq.s32.totalorder %s10, 0
    %p91 = por %p89, %p90
    %p92 = scmp.ne.s32.totalorder %s81, %s84
    %p93 = scmp.eq.s32.totalorder %s15, 1
    %p94 = por %p92, %p93
    %p95 = scmp.ne.s32.totalorder %s84, %s85
    %p96 = scmp.eq.s32.totalorder %s15, 0
    %p97 = por %p95, %p96
    %p98 = scmp.ne.s32.totalorder %s84, %s85
    %p99 = scmp.eq.s32.totalorder %s16, 1
    %p100 = por %p98, %p99
    %p102 = scmp.ne.s32.totalorder %s85, %s101
    %p103 = scmp.eq.s32.totalorder %s16, 0
    %p104 = por %p102, %p103
    %s105 = ssub.s32 %s17, %s29
    %s106 = ssub.s32 %s18, %s25
    %s107 = sor.u32 %s105, %s106
    %p108 = scmp.eq.s32.totalorder %s107, 0
    %s110 = sadd.s32 %s109, 1
    %s111 = scalar_select %p108, %s109, %s110
    %p114 = pneg %p108
    %p115 = scmp.eq.s32.totalorder %s10, 1
    %p116 = por %p114, %p115
    %p117 = scmp.ne.s32.totalorder %s109, %s112
    %p118 = scmp.eq.s32.totalorder %s10, 0
    %p119 = por %p117, %p118
    %p120 = scmp.ne.s32.totalorder %s109, %s112
    %p121 = scmp.eq.s32.totalorder %s15, 1
    %p122 = por %p120, %p121
    %p123 = scmp.ne.s32.totalorder %s112, %s113
    %p124 = scmp.eq.s32.totalorder %s15, 0
    %p125 = por %p123, %p124
    %p126 = scmp.ne.s32.totalorder %s112, %s113
    %p127 = scmp.eq.s32.totalorder %s16, 1
    %p128 = por %p126, %p127
    %p130 = scmp.ne.s32.totalorder %s113, %s129
    %p131 = scmp.eq.s32.totalorder %s16, 0
    %p132 = por %p130, %p131
    %p133 = scmp.le.s32.totalorder 1, %s10
    %p134 = scmp.lt.s32.totalorder %s10, 3
    %p135 = pnand %p133, %p134
    %p136 = pneg %p135
    // Predicated region
    $region9: #{cam_module.3} parent=5 // pred_check
      _
    $region10: #{cam_module.3} parent=5 // pred_check_branch
      %138 = sbr.rel (%p135) target = $region12
    $region11: #{cam_module.3} parent=5 // pred_region
      %s139 = ssub.s32 %s10, 1
      // Predicated region
      $region13: #{cam_module.3} parent=11 // pred_check
        %p140 = pneg %p43
      $region14: #{cam_module.3} parent=11 // pred_check_branch
        %142 = sbr.rel (%p140) target = $region16
      $region15: #{cam_module.3} parent=11 // pred_region
        _
      $region16: #{cam_module.3} parent=11 // pred_fallthru
        _
    $region12: #{cam_module.3} parent=5 // pred_fallthru
      _
    %p143 = scmp.lt.s32.totalorder %s10, 2
    // Predicated region
    $region17: #{cam_module.3} parent=5 // pred_check
      %p144 = pneg %p143
    $region18: #{cam_module.3} parent=5 // pred_check_branch
      %146 = sbr.rel (%p144) target = $region20
    $region19: #{cam_module.3} parent=5 // pred_region
      // Predicated region
      $region21: #{cam_module.3} parent=19 // pred_check
        %p147 = pneg %p63
      $region22: #{cam_module.3} parent=19 // pred_check_branch
        %149 = sbr.rel (%p147) target = $region24
      $region23: #{cam_module.3} parent=19 // pred_region
        %p150 = scmp.lt.s32.totalorder %s17, 1
        %s151 = scalar_select %p150, %s17, 1
        %s152 = smul.addr %s151, 8
        %s153 = scalar_lea.vmem %s1, %s152
      $region24: #{cam_module.3} parent=19 // pred_fallthru
        _
      // Predicated region
      $region25: #{cam_module.3} parent=19 // pred_check
        %p154 = pneg %p91
      $region26: #{cam_module.3} parent=19 // pred_check_branch
        %156 = sbr.rel (%p154) target = $region28
      $region27: #{cam_module.3} parent=19 // pred_region
        %s157 = smul.u32 2, %s18
        %p158 = scmp.lt.s32.totalorder %s17, 1
        %s159 = scalar_select %p158, %s17, 1
        %p160 = scmp.lt.s32.totalorder %s157, 1
        %s161 = scalar_select %p160, %s157, 1
        %s162 = smul.addr %s159, 2
        %s163 = sadd.s32 %s161, %s162
        %s164 = smul.addr %s163, 8
        %s165 = scalar_lea.vmem %s2, %s164
        %s166 = smul.u32 2, %s18
      $region28: #{cam_module.3} parent=19 // pred_fallthru
        _
    $region20: #{cam_module.3} parent=5 // pred_fallthru
      _
    %p167 = scmp.le.s32.totalorder 1, %s10
    %p168 = scmp.lt.s32.totalorder %s10, 3
    %p169 = pnand %p167, %p168
    %p170 = pneg %p169
    // Predicated region
    $region29: #{cam_module.3} parent=5 // pred_check
      _
    $region30: #{cam_module.3} parent=5 // pred_check_branch
      %172 = sbr.rel (%p169) target = $region32
    $region31: #{cam_module.3} parent=5 // pred_region
      %s173 = ssub.s32 %s10, 1
      %p174 = pneg %p43
      %p175 = pneg %p40
      %p176 = scmp.lt.s32.totalorder %s19, 1
      %s177 = scalar_select %p176, %s19, 1
      %s178 = smul.addr %s177, 8
      %s179 = scalar_lea.vmem %s1, %s178
      %p180 = pneg %p69
      %p181 = pneg %p66
      %s182 = smul.u32 2, %s20
      %p183 = scmp.lt.s32.totalorder %s19, 1
      %s184 = scalar_select %p183, %s19, 1
      %p185 = scmp.lt.s32.totalorder %s182, 1
      %s186 = scalar_select %p185, %s182, 1
      %s187 = smul.addr %s184, 2
      %s188 = sadd.s32 %s186, %s187
      %s189 = smul.addr %s188, 8
      %s190 = scalar_lea.vmem %s2, %s189
      %p191 = pneg %p97
      %p192 = pneg %p94
      %p193 = pneg %p125
      %p194 = pneg %p122
      %s195 = smul.u32 2, %s20
      %p196 = scmp.lt.s32.totalorder %s19, 1
      %s197 = scalar_select %p196, %s19, 1
      %p198 = scmp.lt.s32.totalorder %s195, 1
      %s199 = scalar_select %p198, %s195, 1
      %s200 = smul.addr %s197, 2
      %s201 = sadd.s32 %s199, %s200
      %s202 = smul.addr %s201, 8
      %s203 = scalar_lea.vmem %s3, %s202
      %p204 = scmp.lt.s32.totalorder %s19, 1
      %s205 = scalar_select %p204, %s19, 1
      %s206 = smul.addr %s205, 8
      %s207 = scalar_lea.vmem %s1, %s206
      %s208 = smul.u32 2, %s20
      %p209 = scmp.lt.s32.totalorder %s19, 1
      %s210 = scalar_select %p209, %s19, 1
      %p211 = scmp.lt.s32.totalorder %s208, 1
      %s212 = scalar_select %p211, %s208, 1
      %s213 = smul.addr %s210, 2
      %s214 = sadd.s32 %s212, %s213
      %s215 = smul.addr %s214, 8
      %s216 = scalar_lea.vmem %s2, %s215
      %s217 = smul.u32 2, %s20
      %s218 = smul.u32 2, %s20
      %p219 = scmp.lt.s32.totalorder %s19, 1
      %s220 = scalar_select %p219, %s19, 1
      %p221 = scmp.lt.s32.totalorder %s218, 1
      %s222 = scalar_select %p221, %s218, 1
      %s223 = smul.addr %s220, 2
      %s224 = sadd.s32 %s222, %s223
      %s225 = smul.addr %s224, 8
      %s226 = scalar_lea.vmem %s3, %s225
      %s227 = smul.u32 2, %s20
      %v228 = vld [vmem:[%s216] sm:$0xff]
      %v229 = vld [vmem:[%s216 + $0x8] sm:$0xff]
      %v230 = vld [vmem:[%s207] sm:$0xff]
      %vm231 = vcmask 64512
      %v233 = vsel %vm231, %v230, 0
      %235 = vmatpush.msra.mxu0 0.0
      %236 = vmatpush.msra.mxu0 0.0
      %237 = vmatpush.msra.mxu0 0.0
      %238 = vmatpush.msra.mxu0 0.0
      %239 = vmatpush.msra.mxu0 0.0
      %240 = vmatpush.msra.mxu0 0.0
      %241 = vmatpush.msra.mxu0 0.0
      %242 = vmatpush.msra.mxu0 0.0
      %243 = vmatpush.msra.mxu0 0.0
      %244 = vmatpush.msra.mxu0 0.0
      %245 = vmatpush.msra.mxu0 0.0
      %246 = vmatpush.msra.mxu0 0.0
      %247 = vmatpush.msra.mxu0 0.0
      %248 = vmatpush.msra.mxu0 0.0
      %249 = vmatpush.msra.mxu0 0.0
      %250 = vmatpush.msra.mxu0 %v228
      %251 = vmatmul.f32.gmra.mxu0 %v233
      %v252 = vpop.f32.mrf.mxu0
      %v253 = vadd.f32 0.0, %v252
      %254 = vdwg.mxu0
      %255 = vmatpush.msra.mxu0 0.0
      %256 = vmatpush.msra.mxu0 0.0
      %257 = vmatpush.msra.mxu0 0.0
      %258 = vmatpush.msra.mxu0 0.0
      %259 = vmatpush.msra.mxu0 0.0
      %260 = vmatpush.msra.mxu0 0.0
      %261 = vmatpush.msra.mxu0 0.0
      %262 = vmatpush.msra.mxu0 0.0
      %263 = vmatpush.msra.mxu0 0.0
      %264 = vmatpush.msra.mxu0 0.0
      %265 = vmatpush.msra.mxu0 0.0
      %266 = vmatpush.msra.mxu0 0.0
      %267 = vmatpush.msra.mxu0 0.0
      %268 = vmatpush.msra.mxu0 0.0
      %269 = vmatpush.msra.mxu0 0.0
      %270 = vmatpush.msra.mxu0 %v229
      %271 = vmatmul.f32.gmra.mxu0 %v233
      %v272 = vpop.f32.mrf.mxu0
      %v273 = vadd.f32 0.0, %v272
      %274 = vdwg.mxu0
      %s275 = sld [smem:[#allocation2]]
      %v276 = vstv %s275
      %v277 = vmul.f32 %v276, %v253
      %v278 = vmul.f32 %v276, %v273
      %v279 = vadd.f32 %v277, %v228
      %v280 = vadd.f32 %v278, %v229
      %281 = vst [vmem:[%s226] sm:$0xff] %v279
      %282 = vst [vmem:[%s226 + $0x8] sm:$0xff] %v280
      %s283 = smul.u32 2, %s20
      %p284 = scmp.lt.s32.totalorder %s19, 1
      %s285 = scalar_select %p284, %s19, 1
      %p286 = scmp.lt.s32.totalorder %s283, 1
      %s287 = scalar_select %p286, %s283, 1
      %s288 = smul.addr %s285, 2
      %s289 = sadd.s32 %s287, %s288
      %s290 = smul.addr %s289, 8
      %s291 = scalar_lea.vmem %s3, %s290
      // Predicated region
      $region33: #{cam_module.3} parent=31 // pred_check
        %p292 = pneg %p122
      $region34: #{cam_module.3} parent=31 // pred_check_branch
        %294 = sbr.rel (%p292) target = $region36
      $region35: #{cam_module.3} parent=31 // pred_region
        %s295 = smul.u32 2, %s20
      $region36: #{cam_module.3} parent=31 // pred_fallthru
        _
    $region32: #{cam_module.3} parent=5 // pred_fallthru
      _
    %p296 = scmp.le.s32.totalorder 2, %s10
    // Predicated region
    $region37: #{cam_module.3} parent=5 // pred_check
      %p297 = pneg %p296
    $region38: #{cam_module.3} parent=5 // pred_check_branch
      %299 = sbr.rel (%p297) target = $region40
    $region39: #{cam_module.3} parent=5 // pred_region
      %s300 = ssub.s32 %s10, 2
      // Predicated region
      $region41: #{cam_module.3} parent=39 // pred_check
        %p301 = pneg %p128
      $region42: #{cam_module.3} parent=39 // pred_check_branch
        %303 = sbr.rel (%p301) target = $region44
      $region43: #{cam_module.3} parent=39 // pred_region
        %s304 = smul.u32 2, %s22
        %p305 = scmp.lt.s32.totalorder %s21, 1
        %s306 = scalar_select %p305, %s21, 1
        %p307 = scmp.lt.s32.totalorder %s304, 1
        %s308 = scalar_select %p307, %s304, 1
        %s309 = smul.addr %s306, 2
        %s310 = sadd.s32 %s308, %s309
        %s311 = smul.addr %s310, 8
        %s312 = scalar_lea.vmem %s3, %s311
      $region44: #{cam_module.3} parent=39 // pred_fallthru
        _
    $region40: #{cam_module.3} parent=5 // pred_fallthru
      _
  $region6: #{cam_module.3} parent=0 // loop_footer
    %s14 = sadd.s32 1, %s10
  $region7: #{cam_module.3} parent=0 // loop_footer_branch
    %9 = sbr.rel target = $region3
  $region8: #{cam_module.3} parent=0 // loop_exit
    _

</llo_original>
